<compile_context>
chip_gen: v7x
topology: tpu7x:2x2x1
jax: 0.10.0
libtpu: 0.0.40
codegen_flags: <defaults>
</compile_context>

<pallas_src>
import jax
import jax.numpy as jnp
from jax.experimental import pallas as pl
from jax.experimental.pallas import tpu as pltpu


def _se_kernel(x_ref, w1_ref, b1_ref, w2_ref, b2_ref, o_ref):
    x = x_ref[...]  # native dtype straight to the MXU (no upcast)
    # excitation MLP: Linear -> ReLU -> Linear -> Sigmoid (f32 accumulation)
    h = jnp.dot(x, w1_ref[...], preferred_element_type=jnp.float32) + b1_ref[...]
    h = jnp.maximum(h, 0.0).astype(w2_ref.dtype)
    y = jnp.dot(h, w2_ref[...], preferred_element_type=jnp.float32) + b2_ref[...]
    y = jax.nn.sigmoid(y)
    # gate in the input dtype (cast y down instead of x up)
    o_ref[...] = (x * y.astype(x.dtype)).astype(o_ref.dtype)


def _pick_tile_b(B):
    """Largest reasonable batch tile; keep >= 2 grid steps when B allows it."""
    if B >= 1024:
        return 512
    if B >= 16 and B % 16 == 0:
        return B // 2      # >= 2 grid steps for megacore sharding, multiple of 8
    return B               # small batch: one full-extent block


def se_block(x, w1, b1, w2, b2, *, tile_b=None):
    """x: (B, C). w1: (C, H), b1: (1, H), w2: (H, C), b2: (1, C).

    Weights are stored pre-transposed ((in, out)) relative to PyTorch Linear.
    """
    B, C = x.shape
    H = w1.shape[1]

    # --- lane-dense padding of the feature dim to a multiple of 128 ----------
    C_pad = 128 * pl.cdiv(C, 128)
    if C_pad != C:
        pc = C_pad - C
        x_p = jnp.pad(x, ((0, 0), (0, pc)))
        w1_p = jnp.pad(w1, ((0, pc), (0, 0)))
        w2_p = jnp.pad(w2, ((0, 0), (0, pc)))
        b2_p = jnp.pad(b2, ((0, 0), (0, pc)))
    else:
        x_p, w1_p, w2_p, b2_p = x, w1, w2, b2

    if tile_b is None:
        tile_b = _pick_tile_b(B)
    tile_b = min(tile_b, B)
    grid = (pl.cdiv(B, tile_b),)

    itemsize = jnp.dtype(x.dtype).itemsize
    tile_bytes = tile_b * C_pad * itemsize
    weight_bytes = (C_pad * H + H + H * C_pad + C_pad) * itemsize

    # x + out tiles double-buffered, weights double-buffered, plus slack.
    vmem_bytes = 4 * tile_bytes + 4 * weight_bytes + (4 << 20)
    vmem_limit = int(min(max(vmem_bytes, 32 << 20), 48 << 20))  # fits v7x too

    cost = pl.CostEstimate(
        flops=4 * B * C_pad * H + 3 * B * C_pad,
        transcendentals=B * C_pad,                      # sigmoid exp
        bytes_accessed=2 * B * C_pad * itemsize + weight_bytes,
    )

    out = pl.pallas_call(
        _se_kernel,
        out_shape=jax.ShapeDtypeStruct((B, C_pad), x.dtype),
        grid_spec=pltpu.PrefetchScalarGridSpec(
            num_scalar_prefetch=0,
            grid=grid,
            in_specs=[
                pl.BlockSpec((tile_b, C_pad), lambda i: (i, 0)),   # x tile
                pl.BlockSpec((C_pad, H), lambda i: (0, 0)),        # W1 (full)
                pl.BlockSpec((1, H), lambda i: (0, 0)),            # b1
                pl.BlockSpec((H, C_pad), lambda i: (0, 0)),        # W2 (full)
                pl.BlockSpec((1, C_pad), lambda i: (0, 0)),        # b2
            ],
            out_specs=pl.BlockSpec((tile_b, C_pad), lambda i: (i, 0)),
        ),
        compiler_params=pltpu.CompilerParams(
            dimension_semantics=("parallel",),
            vmem_limit_bytes=vmem_limit,
        ),
        cost_estimate=cost,
    )(x_p, w1_p, b1, w2_p, b2_p)

    return out[:, :C] if C_pad != C else out


def se_block_ref(x, w1, b1, w2, b2):
    h = jnp.maximum(x @ w1 + b1, 0.0)
    y = jax.nn.sigmoid(h @ w2 + b2)
    return x * y


if __name__ == "__main__":
    # SE_Block(num_features=64, reduction_ratio=16) -> hidden = 4
    num_features = 64
    reduction_ratio = 16
    hidden = num_features // reduction_ratio

    key = jax.random.PRNGKey(0)
    kx, kw1, kb1, kw2, kb2 = jax.random.split(key, 5)

    # Deterministic synthetic parameters (PyTorch Linear weight is (out, in);
    # we store the transposed (in, out) form for the kernel).
    w1 = jax.random.normal(kw1, (num_features, hidden), dtype=jnp.float32) * 0.1
    b1 = jax.random.normal(kb1, (1, hidden), dtype=jnp.float32) * 0.1
    w2 = jax.random.normal(kw2, (hidden, num_features), dtype=jnp.float32) * 0.1
    b2 = jax.random.normal(kb2, (1, num_features), dtype=jnp.float32) * 0.1

    # Check both a single-step grid (B=8) and a multi-step grid (B=32, grid=2).
    for batch in (8, 32):
        xk = jax.random.fold_in(kx, batch)
        x = jax.random.normal(xk, (batch, num_features), dtype=jnp.float32)

        out = jax.block_until_ready(se_block(x, w1, b1, w2, b2))
        ref = se_block_ref(x, w1, b1, w2, b2)

        assert out.shape == (batch, num_features)
        assert jnp.allclose(out, ref, atol=1e-5, rtol=1e-5), "mismatch vs reference"

    print("KERNEL_OK")
</pallas_src>

<mosaic_0001>
module attributes {stable_mosaic.version = 11 : i64} {
  func.func @_se_kernel(%arg0: i32, %arg1: memref<8x128xf32, #tpu.memory_space<vmem>>, %arg2: memref<128x4xf32, #tpu.memory_space<vmem>>, %arg3: memref<1x4xf32, #tpu.memory_space<vmem>>, %arg4: memref<4x128xf32, #tpu.memory_space<vmem>>, %arg5: memref<1x128xf32, #tpu.memory_space<vmem>>, %arg6: memref<8x128xf32, #tpu.memory_space<vmem>>) attributes {dimension_semantics = [#tpu.dimension_semantics<parallel>], iteration_bounds = array<i64: 1>, scalar_prefetch = 0 : i64, scratch_operands = 0 : i64, tpu.core_type = #tpu.core_type<tc>, window_params = [{transform_indices = @transform_0, window_bounds = array<i64: 8, 128>}, {pipeline_mode = #tpu.pipeline_mode<synchronous>, transform_indices = @transform_1, window_bounds = array<i64: 128, 4>}, {pipeline_mode = #tpu.pipeline_mode<synchronous>, transform_indices = @transform_2, window_bounds = array<i64: 1, 4>}, {pipeline_mode = #tpu.pipeline_mode<synchronous>, transform_indices = @transform_3, window_bounds = array<i64: 4, 128>}, {pipeline_mode = #tpu.pipeline_mode<synchronous>, transform_indices = @transform_4, window_bounds = array<i64: 1, 128>}, {transform_indices = @transform_5, window_bounds = array<i64: 8, 128>}]} {
    %c0 = arith.constant 0 : index
    %c0_0 = arith.constant 0 : index
    %0 = vector.load %arg1[%c0, %c0_0] : memref<8x128xf32, #tpu.memory_space<vmem>>, vector<8x128xf32>
    %c0_1 = arith.constant 0 : index
    %c0_2 = arith.constant 0 : index
    %1 = vector.load %arg2[%c0_1, %c0_2] : memref<128x4xf32, #tpu.memory_space<vmem>>, vector<128x4xf32>
    %cst = arith.constant dense<0.000000e+00> : vector<8x4xf32>
    %2 = tpu.matmul %0, %1, %cst {dimension_numbers = #tpu.dot_dimension_numbers<[1], [0], [0], [1], [0, 0, 1, 1], [], []>} : vector<8x128xf32>, vector<128x4xf32>, vector<8x4xf32> -> vector<8x4xf32>
    %c0_3 = arith.constant 0 : index
    %c0_4 = arith.constant 0 : index
    %3 = vector.load %arg3[%c0_3, %c0_4] : memref<1x4xf32, #tpu.memory_space<vmem>>, vector<1x4xf32>
    %4 = vector.broadcast %3 : vector<1x4xf32> to vector<8x4xf32>
    %5 = arith.addf %2, %4 : vector<8x4xf32>
    %cst_5 = arith.constant 0.000000e+00 : f32
    %6 = vector.broadcast %cst_5 : f32 to vector<8x4xf32>
    %7 = arith.maximumf %5, %6 : vector<8x4xf32>
    %c0_6 = arith.constant 0 : index
    %c0_7 = arith.constant 0 : index
    %8 = vector.load %arg4[%c0_6, %c0_7] : memref<4x128xf32, #tpu.memory_space<vmem>>, vector<4x128xf32>
    %cst_8 = arith.constant dense<0.000000e+00> : vector<8x128xf32>
    %9 = tpu.matmul %7, %8, %cst_8 {dimension_numbers = #tpu.dot_dimension_numbers<[1], [0], [0], [1], [0, 0, 1, 1], [], []>} : vector<8x4xf32>, vector<4x128xf32>, vector<8x128xf32> -> vector<8x128xf32>
    %c0_9 = arith.constant 0 : index
    %c0_10 = arith.constant 0 : index
    %10 = vector.load %arg5[%c0_9, %c0_10] : memref<1x128xf32, #tpu.memory_space<vmem>>, vector<1x128xf32>
    %11 = vector.broadcast %10 : vector<1x128xf32> to vector<8x128xf32>
    %12 = arith.addf %9, %11 : vector<8x128xf32>
    %13 = arith.negf %12 : vector<8x128xf32>
    %14 = math.exp %13 : vector<8x128xf32>
    %cst_11 = arith.constant 1.000000e+00 : f32
    %15 = vector.broadcast %cst_11 : f32 to vector<8x128xf32>
    %16 = arith.addf %15, %14 : vector<8x128xf32>
    %17 = arith.divf %15, %16 : vector<8x128xf32>
    %18 = arith.mulf %0, %17 : vector<8x128xf32>
    %c0_12 = arith.constant 0 : index
    %c0_13 = arith.constant 0 : index
    %19 = vector.load %arg6[%c0_12, %c0_13] : memref<8x128xf32, #tpu.memory_space<vmem>>, vector<8x128xf32>
    tpu.vector_store %arg6[%c0_12, %c0_13], %18 {strides = array<i32>} : memref<8x128xf32, #tpu.memory_space<vmem>>, vector<8x128xf32>,
    return
  }
  func.func @transform_0(%arg0: i32) -> (i32, i32) {
    %c0_i32 = arith.constant 0 : i32
    %c0_i32_0 = arith.constant 0 : i32
    return %arg0, %c0_i32 : i32, i32
  }
  func.func @transform_1(%arg0: i32) -> (i32, i32) {
    %c0_i32 = arith.constant 0 : i32
    %c0_i32_0 = arith.constant 0 : i32
    %c0_i32_1 = arith.constant 0 : i32
    return %c0_i32, %c0_i32_0 : i32, i32
  }
  func.func @transform_2(%arg0: i32) -> (i32, i32) {
    %c0_i32 = arith.constant 0 : i32
    %c0_i32_0 = arith.constant 0 : i32
    %c0_i32_1 = arith.constant 0 : i32
    return %c0_i32, %c0_i32_0 : i32, i32
  }
  func.func @transform_3(%arg0: i32) -> (i32, i32) {
    %c0_i32 = arith.constant 0 : i32
    %c0_i32_0 = arith.constant 0 : i32
    %c0_i32_1 = arith.constant 0 : i32
    return %c0_i32, %c0_i32_0 : i32, i32
  }
  func.func @transform_4(%arg0: i32) -> (i32, i32) {
    %c0_i32 = arith.constant 0 : i32
    %c0_i32_0 = arith.constant 0 : i32
    %c0_i32_1 = arith.constant 0 : i32
    return %c0_i32, %c0_i32_0 : i32, i32
  }
  func.func @transform_5(%arg0: i32) -> (i32, i32) {
    %c0_i32 = arith.constant 0 : i32
    %c0_i32_0 = arith.constant 0 : i32
    return %arg0, %c0_i32 : i32, i32
  }
}

</mosaic_0001>

<llo_original>
// kernel: tpu_custom_call.1
$region0: #{tpu_custom_call.1}
  #allocation0 [shape = 'u32[]', space=smem, size = 0x4, offset = 0x4, fixed_abs, tag = 'smem constant byte address 0x4 - core index']
  #allocation1 [shape = 'u32[144,128]{1,0:T(1,128)}', space=vmem, size = 0x12000, scoped, tag = 'internal scratch']
  %s0 = inlined_call_operand.vmem [shape: f32[8,128], index: 0, kind: input, shape index: {}]
  %s1 = inlined_call_operand.vmem [shape: f32[128,4], index: 1, kind: input, shape index: {}]
  %s2 = inlined_call_operand.vmem [shape: f32[1,4], index: 2, kind: input, shape index: {}]
  %s3 = inlined_call_operand.vmem [shape: f32[4,128], index: 3, kind: input, shape index: {}]
  %s4 = inlined_call_operand.vmem [shape: f32[1,128], index: 4, kind: input, shape index: {}]
  %s5 = inlined_call_operand.hbm [shape: f32[8,128], index: 5, kind: output, shape index: {}]
  %s6 = sld [smem:[#allocation0]]
  $region30: #{tpu_custom_call.1} parent=0
    _
  %s8 = ssub.s32 1, %s6
  %s9 = scalar_select 0, %s8, %s6
  $region1: #{tpu_custom_call.1} parent=0
    #allocation2 [shape = 'u8[4096]{0}', space=vmem, size = 0x1000, scoped, tag = 'output window, operand 0, single buffered']
    #allocation3 [shape = 's32[1]{0}', space=sflag, size = 0x4, scoped, tag = 'scoped memory for tpu_custom_call.1']
    %10 = vsyncpa [#allocation3], 0
    // Predicated region
    $region2: #{tpu_custom_call.1} parent=1 // pred_check
      _
    $region3: #{tpu_custom_call.1} parent=1 // pred_check_branch
      %12 = sbr.rel (0) target = $region5
    $region4: #{tpu_custom_call.1} parent=1 // pred_region
      _
    $region5: #{tpu_custom_call.1} parent=1 // pred_fallthru
      _
    // Predicated region
    $region6: #{tpu_custom_call.1} parent=1 // pred_check
      _
    $region7: #{tpu_custom_call.1} parent=1 // pred_check_branch
      %14 = sbr.rel (0) target = $region9
    $region8: #{tpu_custom_call.1} parent=1 // pred_region
      _
    $region9: #{tpu_custom_call.1} parent=1 // pred_fallthru
      _
    // Predicated region
    $region10: #{tpu_custom_call.1} parent=1 // pred_check
      _
    $region11: #{tpu_custom_call.1} parent=1 // pred_check_branch
      %16 = sbr.rel (0) target = $region13
    $region12: #{tpu_custom_call.1} parent=1 // pred_region
      _
    $region13: #{tpu_custom_call.1} parent=1 // pred_fallthru
      _
    // Predicated region
    $region14: #{tpu_custom_call.1} parent=1 // pred_check
      _
    $region15: #{tpu_custom_call.1} parent=1 // pred_check_branch
      %18 = sbr.rel (0) target = $region17
    $region16: #{tpu_custom_call.1} parent=1 // pred_region
      _
    $region17: #{tpu_custom_call.1} parent=1 // pred_fallthru
      _
    // Predicated region
    $region18: #{tpu_custom_call.1} parent=1 // pred_check
      _
    $region19: #{tpu_custom_call.1} parent=1 // pred_check_branch
      %20 = sbr.rel (0) target = $region21
    $region20: #{tpu_custom_call.1} parent=1 // pred_region
      _
    $region21: #{tpu_custom_call.1} parent=1 // pred_fallthru
      _
    %v21 = vld [vmem:[%s0] sm:$0xff]
    %v22 = vld [vmem:[%s1] sm:$0xff]
    %v23 = vld [vmem:[%s1 + $0x8] sm:$0xff]
    %v24 = vld [vmem:[%s1 + $0x10] sm:$0xff]
    %v25 = vld [vmem:[%s1 + $0x18] sm:$0xff]
    %v26 = vld [vmem:[%s1 + $0x20] sm:$0xff]
    %v27 = vld [vmem:[%s1 + $0x28] sm:$0xff]
    %v28 = vld [vmem:[%s1 + $0x30] sm:$0xff]
    %v29 = vld [vmem:[%s1 + $0x38] sm:$0xff]
    %v30 = vld [vmem:[%s1 + $0x40] sm:$0xff]
    %v31 = vld [vmem:[%s1 + $0x48] sm:$0xff]
    %v32 = vld [vmem:[%s1 + $0x50] sm:$0xff]
    %v33 = vld [vmem:[%s1 + $0x58] sm:$0xff]
    %v34 = vld [vmem:[%s1 + $0x60] sm:$0xff]
    %v35 = vld [vmem:[%s1 + $0x68] sm:$0xff]
    %v36 = vld [vmem:[%s1 + $0x70] sm:$0xff]
    %v37 = vld [vmem:[%s1 + $0x78] sm:$0xff]
    %v38 = vld [vmem:[%s2] sm:$0x1]
    %v40 = vlaneseq
    %v41 = vshrl.u32 %v40, 7
    %v42 = vsub.s32 0, %v41
    %v43 = vrot.slane %v38, %v42
    %45 = vmatprep.subr.mxu0 0.0
    %46 = vmatpush1.msra.mxu0 %v22
    %47 = vmatprep.subr.mxu0 0.0
    %48 = vmatpush1.msra.mxu0 %v23
    %49 = vmatprep.subr.mxu0 0.0
    %50 = vmatpush1.msra.mxu0 %v24
    %51 = vmatprep.subr.mxu0 0.0
    %52 = vmatpush1.msra.mxu0 %v25
    %53 = vmatprep.subr.mxu0 0.0
    %54 = vmatpush1.msra.mxu0 %v26
    %55 = vmatprep.subr.mxu0 0.0
    %56 = vmatpush1.msra.mxu0 %v27
    %57 = vmatprep.subr.mxu0 0.0
    %58 = vmatpush1.msra.mxu0 %v28
    %59 = vmatprep.subr.mxu0 0.0
    %60 = vmatpush1.msra.mxu0 %v29
    %61 = vmatprep.subr.mxu0 0.0
    %62 = vmatpush1.msra.mxu0 %v30
    %63 = vmatprep.subr.mxu0 0.0
    %64 = vmatpush1.msra.mxu0 %v31
    %65 = vmatprep.subr.mxu0 0.0
    %66 = vmatpush1.msra.mxu0 %v32
    %67 = vmatprep.subr.mxu0 0.0
    %68 = vmatpush1.msra.mxu0 %v33
    %69 = vmatprep.subr.mxu0 0.0
    %70 = vmatpush1.msra.mxu0 %v34
    %71 = vmatprep.subr.mxu0 0.0
    %72 = vmatpush1.msra.mxu0 %v35
    %73 = vmatprep.subr.mxu0 0.0
    %74 = vmatpush1.msra.mxu0 %v36
    %75 = vmatprep.subr.mxu0 0.0
    %76 = vmatpush1.msra.mxu0 %v37
    %77 = vmatprep.subr.mxu0 0.0
    %78 = vmatpush1.msra.mxu0 0.0
    %79 = vmatprep.subr.mxu0 0.0
    %80 = vmatpush1.msra.mxu0 0.0
    %81 = vmatprep.subr.mxu0 0.0
    %82 = vmatpush1.msra.mxu0 0.0
    %83 = vmatprep.subr.mxu0 0.0
    %84 = vmatpush1.msra.mxu0 0.0
    %85 = vmatprep.subr.mxu0 0.0
    %86 = vmatpush1.msra.mxu0 0.0
    %87 = vmatprep.subr.mxu0 0.0
    %88 = vmatpush1.msra.mxu0 0.0
    %89 = vmatprep.subr.mxu0 0.0
    %90 = vmatpush1.msra.mxu0 0.0
    %91 = vmatprep.subr.mxu0 0.0
    %92 = vmatpush1.msra.mxu0 0.0
    %93 = vmatprep.subr.mxu0 0.0
    %94 = vmatpush1.msra.mxu0 0.0
    %95 = vmatprep.subr.mxu0 0.0
    %96 = vmatpush1.msra.mxu0 0.0
    %97 = vmatprep.subr.mxu0 0.0
    %98 = vmatpush1.msra.mxu0 0.0
    %99 = vmatprep.subr.mxu0 0.0
    %100 = vmatpush1.msra.mxu0 0.0
    %101 = vmatprep.subr.mxu0 0.0
    %102 = vmatpush1.msra.mxu0 0.0
    %103 = vmatprep.subr.mxu0 0.0
    %104 = vmatpush1.msra.mxu0 0.0
    %105 = vmatprep.subr.mxu0 0.0
    %106 = vmatpush1.msra.mxu0 0.0
    %107 = vmatprep.subr.mxu0 0.0
    %108 = vmatpush1.msra.mxu0 0.0
    %109 = vmatprep.mubr.f32.mxu0 0.0
    %110 = vmatmul.mubr.f32.gmra.mrb[0].mxu0 %v21
    %v111 = vpop.f32.mrb[0].mxu0
    %v112 = vadd.f32 %v43, %v111
    %v113 = vpop.f32.mrb[0].mxu0
    %114 = vdwg.mxu0
    %v115 = vmax.f32 %v112, 0.0
    %v116 = vld [vmem:[%s3] sm:$0xf]
    %v117 = vld [vmem:[%s4] sm:$0x1]
    %v119 = vlaneseq
    %v120 = vshrl.u32 %v119, 7
    %v121 = vsub.s32 0, %v120
    %v122 = vrot.slane %v117, %v121
    %vm124 = vcmask 31744
    %v126 = vsel %vm124, %v115, 0
    %vm128 = vcmask 1043456
    %v130 = vsel %vm128, %v116, 0
    %132 = vmatprep.subr.mxu0 0.0
    %133 = vmatpush1.msra.mxu0 %v130
    %134 = vmatprep.subr.mxu0 0.0
    %135 = vmatpush1.msra.mxu0 0.0
    %136 = vmatprep.subr.mxu0 0.0
    %137 = vmatpush1.msra.mxu0 0.0
    %138 = vmatprep.subr.mxu0 0.0
    %139 = vmatpush1.msra.mxu0 0.0
    %140 = vmatprep.subr.mxu0 0.0
    %141 = vmatpush1.msra.mxu0 0.0
    %142 = vmatprep.subr.mxu0 0.0
    %143 = vmatpush1.msra.mxu0 0.0
    %144 = vmatprep.subr.mxu0 0.0
    %145 = vmatpush1.msra.mxu0 0.0
    %146 = vmatprep.subr.mxu0 0.0
    %147 = vmatpush1.msra.mxu0 0.0
    %148 = vmatprep.subr.mxu0 0.0
    %149 = vmatpush1.msra.mxu0 0.0
    %150 = vmatprep.subr.mxu0 0.0
    %151 = vmatpush1.msra.mxu0 0.0
    %152 = vmatprep.subr.mxu0 0.0
    %153 = vmatpush1.msra.mxu0 0.0
    %154 = vmatprep.subr.mxu0 0.0
    %155 = vmatpush1.msra.mxu0 0.0
    %156 = vmatprep.subr.mxu0 0.0
    %157 = vmatpush1.msra.mxu0 0.0
    %158 = vmatprep.subr.mxu0 0.0
    %159 = vmatpush1.msra.mxu0 0.0
    %160 = vmatprep.subr.mxu0 0.0
    %161 = vmatpush1.msra.mxu0 0.0
    %162 = vmatprep.subr.mxu0 0.0
    %163 = vmatpush1.msra.mxu0 0.0
    %164 = vmatprep.subr.mxu0 0.0
    %165 = vmatpush1.msra.mxu0 0.0
    %166 = vmatprep.subr.mxu0 0.0
    %167 = vmatpush1.msra.mxu0 0.0
    %168 = vmatprep.subr.mxu0 0.0
    %169 = vmatpush1.msra.mxu0 0.0
    %170 = vmatprep.subr.mxu0 0.0
    %171 = vmatpush1.msra.mxu0 0.0
    %172 = vmatprep.subr.mxu0 0.0
    %173 = vmatpush1.msra.mxu0 0.0
    %174 = vmatprep.subr.mxu0 0.0
    %175 = vmatpush1.msra.mxu0 0.0
    %176 = vmatprep.subr.mxu0 0.0
    %177 = vmatpush1.msra.mxu0 0.0
    %178 = vmatprep.subr.mxu0 0.0
    %179 = vmatpush1.msra.mxu0 0.0
    %180 = vmatprep.subr.mxu0 0.0
    %181 = vmatpush1.msra.mxu0 0.0
    %182 = vmatprep.subr.mxu0 0.0
    %183 = vmatpush1.msra.mxu0 0.0
    %184 = vmatprep.subr.mxu0 0.0
    %185 = vmatpush1.msra.mxu0 0.0
    %186 = vmatprep.subr.mxu0 0.0
    %187 = vmatpush1.msra.mxu0 0.0
    %188 = vmatprep.subr.mxu0 0.0
    %189 = vmatpush1.msra.mxu0 0.0
    %190 = vmatprep.subr.mxu0 0.0
    %191 = vmatpush1.msra.mxu0 0.0
    %192 = vmatprep.subr.mxu0 0.0
    %193 = vmatpush1.msra.mxu0 0.0
    %194 = vmatprep.subr.mxu0 0.0
    %195 = vmatpush1.msra.mxu0 0.0
    %196 = vmatprep.mubr.f32.mxu0 0.0
    %197 = vmatmul.mubr.f32.gmra.mrb[0].mxu0 %v126
    %v198 = vpop.f32.mrb[0].mxu0
    %v199 = vadd.f32 %v122, %v198
    %v200 = vpop.f32.mrb[0].mxu0
    %201 = vdwg.mxu0
    %v202 = vxor.u32 %v199, 2147483648
    %v203 = vmul.f32 %v202, 1.442695
    %v204 = vpow.pop %v203
    %v205 = vadd.f32 %v204, 1.0
    %v206 = vrcp.pop %v205
    %v207 = vmul.f32 1.0, %v206
    %v208 = vmul.f32 %v21, %v207
    %209 = vst [vmem:[#allocation2] sm:$0xff] %v208
    // Predicated region
    $region22: #{tpu_custom_call.1} parent=1 // pred_check
      _
    $region23: #{tpu_custom_call.1} parent=1 // pred_check_branch
      %211 = sbr.rel (0) target = $region25
    $region24: #{tpu_custom_call.1} parent=1 // pred_region
      %s213 = ssub.s32 128, 128
      %214 = vsyncadd [#allocation3], %s213
      %s216 = sshll.u32 [#allocation2], 4
      %s217 = int_to_ptr.vmem [resolvable:$true] %s216
      %219 = dma.vmem_to_hbm [thread:$0]  %s217, 128, %s5, [#allocation3]
    $region25: #{tpu_custom_call.1} parent=1 // pred_fallthru
      _
    // Predicated region
    $region26: #{tpu_custom_call.1} parent=1 // pred_check
      _
    $region27: #{tpu_custom_call.1} parent=1 // pred_check_branch
      %221 = sbr.rel (0) target = $region29
    $region28: #{tpu_custom_call.1} parent=1 // pred_region
      %222 = dma.done [#allocation3], 128
    $region29: #{tpu_custom_call.1} parent=1 // pred_fallthru
      _
    %223 = vsyncpa [#allocation3], 1

</llo_original>
